<compile_context>
chip_gen: v5e
topology: v5e:2x2
jax: 0.10.0
libtpu: 0.0.40
codegen_flags: <defaults>
</compile_context>

<pallas_src>
import math
import functools

import jax
import jax.numpy as jnp
from jax import lax
from jax.experimental import pallas as pl
from jax.experimental.pallas import tpu as pltpu


# --------------------------------------------------------------------------------------
# Fused multi-head attention kernel: grid over batch blocks.
# --------------------------------------------------------------------------------------
def _mha_kernel(*refs, heads, dk, dv, bblk, lq, dm, has_mask, compute_dtype):
    if has_mask:
        (q_ref, k_ref, v_ref, mask_ref,
         wq_ref, wk_ref, wv_ref, wo_ref, bo_ref, out_ref, attn_scr) = refs
    else:
        (q_ref, k_ref, v_ref,
         wq_ref, wk_ref, wv_ref, wo_ref, bo_ref, out_ref, attn_scr) = refs
        mask_ref = None

    f32 = jnp.float32
    lc = k_ref.shape[1]
    d = q_ref.shape[2]

    # Fold the batch block into the matmul M dimension.
    q2d = q_ref[...].reshape(bblk * lq, d).astype(compute_dtype)
    k2d = k_ref[...].reshape(bblk * lc, d).astype(compute_dtype)
    v2d = v_ref[...].reshape(bblk * lc, d).astype(compute_dtype)

    wq = wq_ref[...].astype(compute_dtype)        # (D, H*Dk)   (1/sqrt(dk) pre-folded)
    wk = wk_ref[...].astype(compute_dtype)        # (D, H*Dk)
    wv = wv_ref[...].astype(compute_dtype)        # (D, H*Dv)
    wo = wo_ref[...].astype(compute_dtype)        # (H*Dv, Dm)
    bo = bo_ref[...].astype(f32)                  # (1, Dm)

    # One MXU matmul per projection for ALL heads & ALL batch rows in the block.
    # Cast results to compute_dtype so every downstream matmul has bf16 operands
    # (f32 accumulation) when compute_dtype=bf16.
    Q = jnp.dot(q2d, wq, preferred_element_type=f32).astype(compute_dtype)   # (B*Lq, H*Dk)
    K = jnp.dot(k2d, wk, preferred_element_type=f32).astype(compute_dtype)   # (B*Lc, H*Dk)
    V = jnp.dot(v2d, wv, preferred_element_type=f32).astype(compute_dtype)   # (B*Lc, H*Dv)

    if has_mask:
        neg = (1.0 - mask_ref[...].astype(f32)) * (-1e30)                    # (Bblk, Lq, Lc) f32

    # bblk and heads are small compile-time constants -> static unroll, static slices.
    for b in range(bblk):
        Qb = Q[b * lq:(b + 1) * lq, :]
        Kb = K[b * lc:(b + 1) * lc, :]
        Vb = V[b * lc:(b + 1) * lc, :]
        for h in range(heads):
            Qh = Qb[:, h * dk:(h + 1) * dk]       # (Lq, Dk)
            Kh = Kb[:, h * dk:(h + 1) * dk]       # (Lc, Dk)
            Vh = Vb[:, h * dv:(h + 1) * dv]       # (Lc, Dv)

            # Q_h @ K_h^T without an in-kernel transpose: contract last dims.
            logits = lax.dot_general(
                Qh, Kh, dimension_numbers=(((1,), (1,)), ((), ())),
                preferred_element_type=f32)                                   # (Lq, Lc) f32
            if has_mask:
                logits = logits + neg[b]

            # Softmax over the context axis, kept in f32.
            m = jnp.max(logits, axis=-1, keepdims=True)
            e = jnp.exp(logits - m)
            probs = e * pl.reciprocal(jnp.sum(e, axis=-1, keepdims=True), approx=True)

            attn = jnp.dot(probs.astype(compute_dtype), Vh,
                           preferred_element_type=f32)                        # (Lq, Dv) f32

            # Lane-stacked scratch: (Bblk*Lq, H*Dv).
            attn_scr[b * lq:(b + 1) * lq, h * dv:(h + 1) * dv] = attn

    # ONE output-projection matmul for the whole block (K = H*Dv, M = Bblk*Lq), + bias.
    attn_all = attn_scr[...].astype(compute_dtype)
    out = jnp.dot(attn_all, wo, preferred_element_type=f32) + bo              # (Bblk*Lq, Dm)
    out_ref[...] = out.reshape(bblk, lq, dm).astype(out_ref.dtype)


def _pick_bblk(batch, max_bblk=8):
    bblk = max(1, min(batch, max_bblk))
    while batch % bblk:
        bblk -= 1
    return bblk


def multi_head_attention(q, k, v, mask, wq_s, wk_s, wv_s, wo_t, bo, *,
                         heads, dk, dv, compute_dtype=jnp.bfloat16,
                         out_dtype=None, max_bblk=8):
    B, Lq, D = q.shape
    Lc = k.shape[1]
    Dm = wo_t.shape[1]
    out_dtype = out_dtype if out_dtype is not None else q.dtype
    has_mask = mask is not None

    bblk = _pick_bblk(B, max_bblk)
    grid = (B // bblk,)

    kernel = functools.partial(
        _mha_kernel, heads=heads, dk=dk, dv=dv, bblk=bblk, lq=Lq, dm=Dm,
        has_mask=has_mask, compute_dtype=compute_dtype)

    act_specs = [
        pl.BlockSpec((bblk, Lq, D), lambda b: (b, 0, 0)),
        pl.BlockSpec((bblk, Lc, D), lambda b: (b, 0, 0)),
        pl.BlockSpec((bblk, Lc, D), lambda b: (b, 0, 0)),
    ]
    mask_specs = ([pl.BlockSpec((bblk, Lq, Lc), lambda b: (b, 0, 0))]
                  if has_mask else [])
    # TODO(synk): weights get double-buffered despite a constant index_map; for
    #             production d_model single-buffer them / budget VMEM explicitly.
    w_specs = [
        pl.BlockSpec((D, heads * dk), lambda b: (0, 0)),
        pl.BlockSpec((D, heads * dk), lambda b: (0, 0)),
        pl.BlockSpec((D, heads * dv), lambda b: (0, 0)),
        pl.BlockSpec((heads * dv, Dm), lambda b: (0, 0)),
        pl.BlockSpec((1, Dm), lambda b: (0, 0)),
    ]

    args = (q, k, v) + ((mask,) if has_mask else ()) + (wq_s, wk_s, wv_s, wo_t, bo)

    return pl.pallas_call(
        kernel,
        out_shape=jax.ShapeDtypeStruct((B, Lq, Dm), out_dtype),
        grid=grid,
        in_specs=act_specs + mask_specs + w_specs,
        out_specs=pl.BlockSpec((bblk, Lq, Dm), lambda b: (b, 0, 0)),
        scratch_shapes=[pltpu.VMEM((bblk * Lq, heads * dv), jnp.float32)],
        compiler_params=pltpu.CompilerParams(
            dimension_semantics=("parallel",)),   # batch blocks shard across v7x's 2 TCs
    )(*args)


# --------------------------------------------------------------------------------------
# Module wrapper (PyTorch-convention parameters + pre-baked kernel layouts)
# --------------------------------------------------------------------------------------
class MultiHeadAttentionPallas:
    def __init__(self, d_model, key_hidden_size, value_hidden_size, heads, key,
                 compute_dtype=jnp.bfloat16):
        self.d_model = d_model
        self.key_hidden_size = key_hidden_size
        self.value_hidden_size = value_hidden_size
        self.heads = heads
        self.compute_dtype = compute_dtype   # bf16 default: MXU-native on v5e/v6e/v7x

        k1, k2, k3, k4, k5 = jax.random.split(key, 5)
        scale = 0.02
        # PyTorch nn.Linear convention, per-head stacked: (H, out, in).
        self.wq = scale * jax.random.normal(k1, (heads, key_hidden_size, d_model), jnp.float32)
        self.wk = scale * jax.random.normal(k2, (heads, key_hidden_size, d_model), jnp.float32)
        self.wv = scale * jax.random.normal(k3, (heads, value_hidden_size, d_model), jnp.float32)
        # Output linear (with bias): weight (Dm, H*Dv), bias (1, Dm).
        self.wo = scale * jax.random.normal(k4, (d_model, heads * value_hidden_size), jnp.float32)
        self.bo = scale * jax.random.normal(k5, (1, d_model), jnp.float32)

        # One-time host-side layout change: stacked + pre-transposed weights, with
        # 1/sqrt(dk) folded into the Q weights so the kernel never scales the logits.
        self.wq_s = (jnp.transpose(self.wq, (2, 0, 1))
                     .reshape(d_model, heads * key_hidden_size)
                     / math.sqrt(key_hidden_size))
        self.wk_s = jnp.transpose(self.wk, (2, 0, 1)).reshape(d_model, heads * key_hidden_size)
        self.wv_s = jnp.transpose(self.wv, (2, 0, 1)).reshape(d_model, heads * value_hidden_size)
        self.wo_t = self.wo.T                                   # (H*Dv, Dm)

    def __call__(self, origin_query, origin_key, origin_value, mask=None,
                 compute_dtype=None):
        # No wrapper-side casts: pass activations/mask in their native dtype.
        return multi_head_attention(
            origin_query, origin_key, origin_value, mask,
            self.wq_s, self.wk_s, self.wv_s, self.wo_t, self.bo,
            heads=self.heads, dk=self.key_hidden_size, dv=self.value_hidden_size,
            compute_dtype=(compute_dtype if compute_dtype is not None
                           else self.compute_dtype))


# --------------------------------------------------------------------------------------
# Pure-JAX reference (mirrors the PyTorch forward exactly, f32)
# --------------------------------------------------------------------------------------
def reference_forward(mod, q, k, v, mask):
    heads = []
    for h in range(mod.heads):
        Q = q @ mod.wq[h].T
        K = k @ mod.wk[h].T
        V = v @ mod.wv[h].T
        logits = jnp.einsum('bqd,bkd->bqk', Q, K) / math.sqrt(mod.key_hidden_size)
        logits = (1.0 - mask) * (-1e30) + logits
        probs = jax.nn.softmax(logits, axis=2)
        heads.append(jnp.einsum('bqk,bkd->bqd', probs, V))
    multi_head = jnp.concatenate(heads, axis=2)
    return multi_head @ mod.wo.T + mod.bo


if __name__ == "__main__":
    key = jax.random.PRNGKey(0)
    k_param, k_q, k_k, k_v = jax.random.split(key, 4)

    batch, query_len, context_len = 2, 8, 8
    d_model, key_hidden, value_hidden, heads = 32, 16, 16, 4

    mod = MultiHeadAttentionPallas(d_model, key_hidden, value_hidden, heads, k_param)

    q = jax.random.normal(k_q, (batch, query_len, d_model), jnp.float32)
    k = jax.random.normal(k_k, (batch, context_len, d_model), jnp.float32)
    v = jax.random.normal(k_v, (batch, context_len, d_model), jnp.float32)

    # mask: 1 is real value, 0 is masked — mask out the last 2 context positions in batch 1.
    mask = jnp.ones((batch, query_len, context_len), jnp.float32)
    mask = mask.at[1, :, -2:].set(0.0)

    ref = reference_forward(mod, q, k, v, mask)
    ref_nomask = reference_forward(mod, q, k, v, jnp.ones_like(mask))

    # 1) Default bf16 compute path (all matmul operands bf16, f32 accumulation / softmax).
    out_bf16 = jax.block_until_ready(mod(q, k, v, mask))
    assert out_bf16.shape == (batch, query_len, d_model)
    assert jnp.allclose(out_bf16, ref, atol=2e-2, rtol=2e-2), "bf16 path mismatch"

    # 2) f32 compute path (tight tolerance; approx reciprocal in the softmax).
    out_f32 = jax.block_until_ready(mod(q, k, v, mask, compute_dtype=jnp.float32))
    assert jnp.allclose(out_f32, ref, atol=2e-3, rtol=2e-3), "f32 path mismatch"

    # 3) Specialized no-mask path (mask input dropped entirely, no all-ones DMA).
    out_nomask = jax.block_until_ready(mod(q, k, v, None))
    assert jnp.allclose(out_nomask, ref_nomask, atol=2e-2, rtol=2e-2), "no-mask path mismatch"

    print("KERNEL_OK")
</pallas_src>

<mosaic_0001>
module attributes {stable_mosaic.version = 11 : i64} {
  func.func @_mha_kernel(%arg0: i32, %arg1: memref<2x8x32xf32, #tpu.memory_space<vmem>>, %arg2: memref<2x8x32xf32, #tpu.memory_space<vmem>>, %arg3: memref<2x8x32xf32, #tpu.memory_space<vmem>>, %arg4: memref<2x8x8xf32, #tpu.memory_space<vmem>>, %arg5: memref<32x64xf32, #tpu.memory_space<vmem>>, %arg6: memref<32x64xf32, #tpu.memory_space<vmem>>, %arg7: memref<32x64xf32, #tpu.memory_space<vmem>>, %arg8: memref<64x32xf32, #tpu.memory_space<vmem>>, %arg9: memref<1x32xf32, #tpu.memory_space<vmem>>, %arg10: memref<2x8x32xf32, #tpu.memory_space<vmem>>, %arg11: memref<16x64xf32, #tpu.memory_space<vmem>>) attributes {dimension_semantics = [#tpu.dimension_semantics<parallel>], iteration_bounds = array<i64: 1>, scalar_prefetch = 0 : i64, scratch_operands = 1 : i64, tpu.core_type = #tpu.core_type<tc>, window_params = [{transform_indices = @transform_0, window_bounds = array<i64: 2, 8, 32>}, {transform_indices = @transform_1, window_bounds = array<i64: 2, 8, 32>}, {transform_indices = @transform_2, window_bounds = array<i64: 2, 8, 32>}, {transform_indices = @transform_3, window_bounds = array<i64: 2, 8, 8>}, {pipeline_mode = #tpu.pipeline_mode<synchronous>, transform_indices = @transform_4, window_bounds = array<i64: 32, 64>}, {pipeline_mode = #tpu.pipeline_mode<synchronous>, transform_indices = @transform_5, window_bounds = array<i64: 32, 64>}, {pipeline_mode = #tpu.pipeline_mode<synchronous>, transform_indices = @transform_6, window_bounds = array<i64: 32, 64>}, {pipeline_mode = #tpu.pipeline_mode<synchronous>, transform_indices = @transform_7, window_bounds = array<i64: 64, 32>}, {pipeline_mode = #tpu.pipeline_mode<synchronous>, transform_indices = @transform_8, window_bounds = array<i64: 1, 32>}, {transform_indices = @transform_9, window_bounds = array<i64: 2, 8, 32>}]} {
    %c0 = arith.constant 0 : index
    %c0_0 = arith.constant 0 : index
    %c0_1 = arith.constant 0 : index
    %0 = vector.load %arg1[%c0, %c0_0, %c0_1] : memref<2x8x32xf32, #tpu.memory_space<vmem>>, vector<2x8x32xf32>
    %1 = vector.shape_cast %0 : vector<2x8x32xf32> to vector<16x32xf32>
    %2 = arith.truncf %1 : vector<16x32xf32> to vector<16x32xbf16>
    %c0_2 = arith.constant 0 : index
    %c0_3 = arith.constant 0 : index
    %c0_4 = arith.constant 0 : index
    %3 = vector.load %arg2[%c0_2, %c0_3, %c0_4] : memref<2x8x32xf32, #tpu.memory_space<vmem>>, vector<2x8x32xf32>
    %4 = vector.shape_cast %3 : vector<2x8x32xf32> to vector<16x32xf32>
    %5 = arith.truncf %4 : vector<16x32xf32> to vector<16x32xbf16>
    %c0_5 = arith.constant 0 : index
    %c0_6 = arith.constant 0 : index
    %c0_7 = arith.constant 0 : index
    %6 = vector.load %arg3[%c0_5, %c0_6, %c0_7] : memref<2x8x32xf32, #tpu.memory_space<vmem>>, vector<2x8x32xf32>
    %7 = vector.shape_cast %6 : vector<2x8x32xf32> to vector<16x32xf32>
    %8 = arith.truncf %7 : vector<16x32xf32> to vector<16x32xbf16>
    %c0_8 = arith.constant 0 : index
    %c0_9 = arith.constant 0 : index
    %9 = vector.load %arg5[%c0_8, %c0_9] : memref<32x64xf32, #tpu.memory_space<vmem>>, vector<32x64xf32>
    %10 = arith.truncf %9 : vector<32x64xf32> to vector<32x64xbf16>
    %c0_10 = arith.constant 0 : index
    %c0_11 = arith.constant 0 : index
    %11 = vector.load %arg6[%c0_10, %c0_11] : memref<32x64xf32, #tpu.memory_space<vmem>>, vector<32x64xf32>
    %12 = arith.truncf %11 : vector<32x64xf32> to vector<32x64xbf16>
    %c0_12 = arith.constant 0 : index
    %c0_13 = arith.constant 0 : index
    %13 = vector.load %arg7[%c0_12, %c0_13] : memref<32x64xf32, #tpu.memory_space<vmem>>, vector<32x64xf32>
    %14 = arith.truncf %13 : vector<32x64xf32> to vector<32x64xbf16>
    %c0_14 = arith.constant 0 : index
    %c0_15 = arith.constant 0 : index
    %15 = vector.load %arg8[%c0_14, %c0_15] : memref<64x32xf32, #tpu.memory_space<vmem>>, vector<64x32xf32>
    %16 = arith.truncf %15 : vector<64x32xf32> to vector<64x32xbf16>
    %c0_16 = arith.constant 0 : index
    %c0_17 = arith.constant 0 : index
    %17 = vector.load %arg9[%c0_16, %c0_17] : memref<1x32xf32, #tpu.memory_space<vmem>>, vector<1x32xf32>
    %cst = arith.constant dense<0.000000e+00> : vector<16x64xf32>
    %18 = tpu.matmul %2, %10, %cst {dimension_numbers = #tpu.dot_dimension_numbers<[1], [0], [0], [1], [0, 0, 1, 1], [], []>} : vector<16x32xbf16>, vector<32x64xbf16>, vector<16x64xf32> -> vector<16x64xf32>
    %19 = arith.truncf %18 : vector<16x64xf32> to vector<16x64xbf16>
    %cst_18 = arith.constant dense<0.000000e+00> : vector<16x64xf32>
    %20 = tpu.matmul %5, %12, %cst_18 {dimension_numbers = #tpu.dot_dimension_numbers<[1], [0], [0], [1], [0, 0, 1, 1], [], []>} : vector<16x32xbf16>, vector<32x64xbf16>, vector<16x64xf32> -> vector<16x64xf32>
    %21 = arith.truncf %20 : vector<16x64xf32> to vector<16x64xbf16>
    %cst_19 = arith.constant dense<0.000000e+00> : vector<16x64xf32>
    %22 = tpu.matmul %8, %14, %cst_19 {dimension_numbers = #tpu.dot_dimension_numbers<[1], [0], [0], [1], [0, 0, 1, 1], [], []>} : vector<16x32xbf16>, vector<32x64xbf16>, vector<16x64xf32> -> vector<16x64xf32>
    %23 = arith.truncf %22 : vector<16x64xf32> to vector<16x64xbf16>
    %c0_20 = arith.constant 0 : index
    %c0_21 = arith.constant 0 : index
    %c0_22 = arith.constant 0 : index
    %24 = vector.load %arg4[%c0_20, %c0_21, %c0_22] : memref<2x8x8xf32, #tpu.memory_space<vmem>>, vector<2x8x8xf32>
    %cst_23 = arith.constant 1.000000e+00 : f32
    %25 = vector.broadcast %cst_23 : f32 to vector<2x8x8xf32>
    %26 = arith.subf %25, %24 : vector<2x8x8xf32>
    %cst_24 = arith.constant -1.000000e+30 : f32
    %27 = vector.broadcast %cst_24 : f32 to vector<2x8x8xf32>
    %28 = arith.mulf %26, %27 : vector<2x8x8xf32>
    %29 = vector.extract_strided_slice %19 {offsets = [0, 0], sizes = [8, 64], strides = [1, 1]} : vector<16x64xbf16> to vector<8x64xbf16>
    %30 = vector.extract_strided_slice %21 {offsets = [0, 0], sizes = [8, 64], strides = [1, 1]} : vector<16x64xbf16> to vector<8x64xbf16>
    %31 = vector.extract_strided_slice %23 {offsets = [0, 0], sizes = [8, 64], strides = [1, 1]} : vector<16x64xbf16> to vector<8x64xbf16>
    %32 = vector.extract_strided_slice %29 {offsets = [0, 0], sizes = [8, 16], strides = [1, 1]} : vector<8x64xbf16> to vector<8x16xbf16>
    %33 = vector.extract_strided_slice %30 {offsets = [0, 0], sizes = [8, 16], strides = [1, 1]} : vector<8x64xbf16> to vector<8x16xbf16>
    %34 = vector.extract_strided_slice %31 {offsets = [0, 0], sizes = [8, 16], strides = [1, 1]} : vector<8x64xbf16> to vector<8x16xbf16>
    %cst_25 = arith.constant dense<0.000000e+00> : vector<8x8xf32>
    %35 = tpu.matmul %32, %33, %cst_25 {dimension_numbers = #tpu.dot_dimension_numbers<[1], [1], [0], [0], [0, 0, 1, 0], [], []>} : vector<8x16xbf16>, vector<8x16xbf16>, vector<8x8xf32> -> vector<8x8xf32>
    %36 = vector.extract_strided_slice %28 {offsets = [0, 0, 0], sizes = [1, 8, 8], strides = [1, 1, 1]} : vector<2x8x8xf32> to vector<1x8x8xf32>
    %37 = vector.shape_cast %36 : vector<1x8x8xf32> to vector<8x8xf32>
    %38 = arith.addf %35, %37 : vector<8x8xf32>
    %cst_26 = arith.constant dense<0xFF800000> : vector<8xf32>
    %39 = vector.multi_reduction <maximumf>, %38, %cst_26 [1] : vector<8x8xf32> to vector<8xf32>
    %40 = vector.shape_cast %39 : vector<8xf32> to vector<8x1xf32>
    %41 = vector.broadcast %40 : vector<8x1xf32> to vector<8x8xf32>
    %42 = arith.subf %38, %41 : vector<8x8xf32>
    %43 = math.exp %42 : vector<8x8xf32>
    %cst_27 = arith.constant dense<0.000000e+00> : vector<8xf32>
    %44 = vector.multi_reduction <add>, %43, %cst_27 [1] : vector<8x8xf32> to vector<8xf32>
    %45 = vector.shape_cast %44 : vector<8xf32> to vector<8x1xf32>
    %46 = tpu.reciprocal %45 {approx = true} : vector<8x1xf32> -> vector<8x1xf32>
    %47 = vector.broadcast %46 : vector<8x1xf32> to vector<8x8xf32>
    %48 = arith.mulf %43, %47 : vector<8x8xf32>
    %49 = arith.truncf %48 : vector<8x8xf32> to vector<8x8xbf16>
    %cst_28 = arith.constant dense<0.000000e+00> : vector<8x16xf32>
    %50 = tpu.matmul %49, %34, %cst_28 {dimension_numbers = #tpu.dot_dimension_numbers<[1], [0], [0], [1], [0, 0, 1, 1], [], []>} : vector<8x8xbf16>, vector<8x16xbf16>, vector<8x16xf32> -> vector<8x16xf32>
    %c0_29 = arith.constant 0 : index
    %c0_30 = arith.constant 0 : index
    %51 = vector.load %arg11[%c0_29, %c0_30] : memref<16x64xf32, #tpu.memory_space<vmem>>, vector<8x16xf32>
    tpu.vector_store %arg11[%c0_29, %c0_30], %50 {strides = array<i32>} : memref<16x64xf32, #tpu.memory_space<vmem>>, vector<8x16xf32>,
    %52 = vector.extract_strided_slice %29 {offsets = [0, 16], sizes = [8, 16], strides = [1, 1]} : vector<8x64xbf16> to vector<8x16xbf16>
    %53 = vector.extract_strided_slice %30 {offsets = [0, 16], sizes = [8, 16], strides = [1, 1]} : vector<8x64xbf16> to vector<8x16xbf16>
    %54 = vector.extract_strided_slice %31 {offsets = [0, 16], sizes = [8, 16], strides = [1, 1]} : vector<8x64xbf16> to vector<8x16xbf16>
    %cst_31 = arith.constant dense<0.000000e+00> : vector<8x8xf32>
    %55 = tpu.matmul %52, %53, %cst_31 {dimension_numbers = #tpu.dot_dimension_numbers<[1], [1], [0], [0], [0, 0, 1, 0], [], []>} : vector<8x16xbf16>, vector<8x16xbf16>, vector<8x8xf32> -> vector<8x8xf32>
    %56 = vector.extract_strided_slice %28 {offsets = [0, 0, 0], sizes = [1, 8, 8], strides = [1, 1, 1]} : vector<2x8x8xf32> to vector<1x8x8xf32>
    %57 = vector.shape_cast %56 : vector<1x8x8xf32> to vector<8x8xf32>
    %58 = arith.addf %55, %57 : vector<8x8xf32>
    %cst_32 = arith.constant dense<0xFF800000> : vector<8xf32>
    %59 = vector.multi_reduction <maximumf>, %58, %cst_32 [1] : vector<8x8xf32> to vector<8xf32>
    %60 = vector.shape_cast %59 : vector<8xf32> to vector<8x1xf32>
    %61 = vector.broadcast %60 : vector<8x1xf32> to vector<8x8xf32>
    %62 = arith.subf %58, %61 : vector<8x8xf32>
    %63 = math.exp %62 : vector<8x8xf32>
    %cst_33 = arith.constant dense<0.000000e+00> : vector<8xf32>
    %64 = vector.multi_reduction <add>, %63, %cst_33 [1] : vector<8x8xf32> to vector<8xf32>
    %65 = vector.shape_cast %64 : vector<8xf32> to vector<8x1xf32>
    %66 = tpu.reciprocal %65 {approx = true} : vector<8x1xf32> -> vector<8x1xf32>
    %67 = vector.broadcast %66 : vector<8x1xf32> to vector<8x8xf32>
    %68 = arith.mulf %63, %67 : vector<8x8xf32>
    %69 = arith.truncf %68 : vector<8x8xf32> to vector<8x8xbf16>
    %cst_34 = arith.constant dense<0.000000e+00> : vector<8x16xf32>
    %70 = tpu.matmul %69, %54, %cst_34 {dimension_numbers = #tpu.dot_dimension_numbers<[1], [0], [0], [1], [0, 0, 1, 1], [], []>} : vector<8x8xbf16>, vector<8x16xbf16>, vector<8x16xf32> -> vector<8x16xf32>
    %c0_35 = arith.constant 0 : index
    %c16 = arith.constant 16 : index
    %71 = vector.load %arg11[%c0_35, %c16] : memref<16x64xf32, #tpu.memory_space<vmem>>, vector<8x16xf32>
    tpu.vector_store %arg11[%c0_35, %c16], %70 {strides = array<i32>} : memref<16x64xf32, #tpu.memory_space<vmem>>, vector<8x16xf32>,
    %72 = vector.extract_strided_slice %29 {offsets = [0, 32], sizes = [8, 16], strides = [1, 1]} : vector<8x64xbf16> to vector<8x16xbf16>
    %73 = vector.extract_strided_slice %30 {offsets = [0, 32], sizes = [8, 16], strides = [1, 1]} : vector<8x64xbf16> to vector<8x16xbf16>
    %74 = vector.extract_strided_slice %31 {offsets = [0, 32], sizes = [8, 16], strides = [1, 1]} : vector<8x64xbf16> to vector<8x16xbf16>
    %cst_36 = arith.constant dense<0.000000e+00> : vector<8x8xf32>
    %75 = tpu.matmul %72, %73, %cst_36 {dimension_numbers = #tpu.dot_dimension_numbers<[1], [1], [0], [0], [0, 0, 1, 0], [], []>} : vector<8x16xbf16>, vector<8x16xbf16>, vector<8x8xf32> -> vector<8x8xf32>
    %76 = vector.extract_strided_slice %28 {offsets = [0, 0, 0], sizes = [1, 8, 8], strides = [1, 1, 1]} : vector<2x8x8xf32> to vector<1x8x8xf32>
    %77 = vector.shape_cast %76 : vector<1x8x8xf32> to vector<8x8xf32>
    %78 = arith.addf %75, %77 : vector<8x8xf32>
    %cst_37 = arith.constant dense<0xFF800000> : vector<8xf32>
    %79 = vector.multi_reduction <maximumf>, %78, %cst_37 [1] : vector<8x8xf32> to vector<8xf32>
    %80 = vector.shape_cast %79 : vector<8xf32> to vector<8x1xf32>
    %81 = vector.broadcast %80 : vector<8x1xf32> to vector<8x8xf32>
    %82 = arith.subf %78, %81 : vector<8x8xf32>
    %83 = math.exp %82 : vector<8x8xf32>
    %cst_38 = arith.constant dense<0.000000e+00> : vector<8xf32>
    %84 = vector.multi_reduction <add>, %83, %cst_38 [1] : vector<8x8xf32> to vector<8xf32>
    %85 = vector.shape_cast %84 : vector<8xf32> to vector<8x1xf32>
    %86 = tpu.reciprocal %85 {approx = true} : vector<8x1xf32> -> vector<8x1xf32>
    %87 = vector.broadcast %86 : vector<8x1xf32> to vector<8x8xf32>
    %88 = arith.mulf %83, %87 : vector<8x8xf32>
    %89 = arith.truncf %88 : vector<8x8xf32> to vector<8x8xbf16>
    %cst_39 = arith.constant dense<0.000000e+00> : vector<8x16xf32>
    %90 = tpu.matmul %89, %74, %cst_39 {dimension_numbers = #tpu.dot_dimension_numbers<[1], [0], [0], [1], [0, 0, 1, 1], [], []>} : vector<8x8xbf16>, vector<8x16xbf16>, vector<8x16xf32> -> vector<8x16xf32>
    %c0_40 = arith.constant 0 : index
    %c32 = arith.constant 32 : index
    %91 = vector.load %arg11[%c0_40, %c32] : memref<16x64xf32, #tpu.memory_space<vmem>>, vector<8x16xf32>
    tpu.vector_store %arg11[%c0_40, %c32], %90 {strides = array<i32>} : memref<16x64xf32, #tpu.memory_space<vmem>>, vector<8x16xf32>,
    %92 = vector.extract_strided_slice %29 {offsets = [0, 48], sizes = [8, 16], strides = [1, 1]} : vector<8x64xbf16> to vector<8x16xbf16>
    %93 = vector.extract_strided_slice %30 {offsets = [0, 48], sizes = [8, 16], strides = [1, 1]} : vector<8x64xbf16> to vector<8x16xbf16>
    %94 = vector.extract_strided_slice %31 {offsets = [0, 48], sizes = [8, 16], strides = [1, 1]} : vector<8x64xbf16> to vector<8x16xbf16>
    %cst_41 = arith.constant dense<0.000000e+00> : vector<8x8xf32>
    %95 = tpu.matmul %92, %93, %cst_41 {dimension_numbers = #tpu.dot_dimension_numbers<[1], [1], [0], [0], [0, 0, 1, 0], [], []>} : vector<8x16xbf16>, vector<8x16xbf16>, vector<8x8xf32> -> vector<8x8xf32>
    %96 = vector.extract_strided_slice %28 {offsets = [0, 0, 0], sizes = [1, 8, 8], strides = [1, 1, 1]} : vector<2x8x8xf32> to vector<1x8x8xf32>
    %97 = vector.shape_cast %96 : vector<1x8x8xf32> to vector<8x8xf32>
    %98 = arith.addf %95, %97 : vector<8x8xf32>
    %cst_42 = arith.constant dense<0xFF800000> : vector<8xf32>
    %99 = vector.multi_reduction <maximumf>, %98, %cst_42 [1] : vector<8x8xf32> to vector<8xf32>
    %100 = vector.shape_cast %99 : vector<8xf32> to vector<8x1xf32>
    %101 = vector.broadcast %100 : vector<8x1xf32> to vector<8x8xf32>
    %102 = arith.subf %98, %101 : vector<8x8xf32>
    %103 = math.exp %102 : vector<8x8xf32>
    %cst_43 = arith.constant dense<0.000000e+00> : vector<8xf32>
    %104 = vector.multi_reduction <add>, %103, %cst_43 [1] : vector<8x8xf32> to vector<8xf32>
    %105 = vector.shape_cast %104 : vector<8xf32> to vector<8x1xf32>
    %106 = tpu.reciprocal %105 {approx = true} : vector<8x1xf32> -> vector<8x1xf32>
    %107 = vector.broadcast %106 : vector<8x1xf32> to vector<8x8xf32>
    %108 = arith.mulf %103, %107 : vector<8x8xf32>
    %109 = arith.truncf %108 : vector<8x8xf32> to vector<8x8xbf16>
    %cst_44 = arith.constant dense<0.000000e+00> : vector<8x16xf32>
    %110 = tpu.matmul %109, %94, %cst_44 {dimension_numbers = #tpu.dot_dimension_numbers<[1], [0], [0], [1], [0, 0, 1, 1], [], []>} : vector<8x8xbf16>, vector<8x16xbf16>, vector<8x16xf32> -> vector<8x16xf32>
    %c0_45 = arith.constant 0 : index
    %c48 = arith.constant 48 : index
    %111 = vector.load %arg11[%c0_45, %c48] : memref<16x64xf32, #tpu.memory_space<vmem>>, vector<8x16xf32>
    tpu.vector_store %arg11[%c0_45, %c48], %110 {strides = array<i32>} : memref<16x64xf32, #tpu.memory_space<vmem>>, vector<8x16xf32>,
    %112 = vector.extract_strided_slice %19 {offsets = [8, 0], sizes = [8, 64], strides = [1, 1]} : vector<16x64xbf16> to vector<8x64xbf16>
    %113 = vector.extract_strided_slice %21 {offsets = [8, 0], sizes = [8, 64], strides = [1, 1]} : vector<16x64xbf16> to vector<8x64xbf16>
    %114 = vector.extract_strided_slice %23 {offsets = [8, 0], sizes = [8, 64], strides = [1, 1]} : vector<16x64xbf16> to vector<8x64xbf16>
    %115 = vector.extract_strided_slice %112 {offsets = [0, 0], sizes = [8, 16], strides = [1, 1]} : vector<8x64xbf16> to vector<8x16xbf16>
    %116 = vector.extract_strided_slice %113 {offsets = [0, 0], sizes = [8, 16], strides = [1, 1]} : vector<8x64xbf16> to vector<8x16xbf16>
    %117 = vector.extract_strided_slice %114 {offsets = [0, 0], sizes = [8, 16], strides = [1, 1]} : vector<8x64xbf16> to vector<8x16xbf16>
    %cst_46 = arith.constant dense<0.000000e+00> : vector<8x8xf32>
    %118 = tpu.matmul %115, %116, %cst_46 {dimension_numbers = #tpu.dot_dimension_numbers<[1], [1], [0], [0], [0, 0, 1, 0], [], []>} : vector<8x16xbf16>, vector<8x16xbf16>, vector<8x8xf32> -> vector<8x8xf32>
    %119 = vector.extract_strided_slice %28 {offsets = [1, 0, 0], sizes = [1, 8, 8], strides = [1, 1, 1]} : vector<2x8x8xf32> to vector<1x8x8xf32>
    %120 = vector.shape_cast %119 : vector<1x8x8xf32> to vector<8x8xf32>
    %121 = arith.addf %118, %120 : vector<8x8xf32>
    %cst_47 = arith.constant dense<0xFF800000> : vector<8xf32>
    %122 = vector.multi_reduction <maximumf>, %121, %cst_47 [1] : vector<8x8xf32> to vector<8xf32>
    %123 = vector.shape_cast %122 : vector<8xf32> to vector<8x1xf32>
    %124 = vector.broadcast %123 : vector<8x1xf32> to vector<8x8xf32>
    %125 = arith.subf %121, %124 : vector<8x8xf32>
    %126 = math.exp %125 : vector<8x8xf32>
    %cst_48 = arith.constant dense<0.000000e+00> : vector<8xf32>
    %127 = vector.multi_reduction <add>, %126, %cst_48 [1] : vector<8x8xf32> to vector<8xf32>
    %128 = vector.shape_cast %127 : vector<8xf32> to vector<8x1xf32>
    %129 = tpu.reciprocal %128 {approx = true} : vector<8x1xf32> -> vector<8x1xf32>
    %130 = vector.broadcast %129 : vector<8x1xf32> to vector<8x8xf32>
    %131 = arith.mulf %126, %130 : vector<8x8xf32>
    %132 = arith.truncf %131 : vector<8x8xf32> to vector<8x8xbf16>
    %cst_49 = arith.constant dense<0.000000e+00> : vector<8x16xf32>
    %133 = tpu.matmul %132, %117, %cst_49 {dimension_numbers = #tpu.dot_dimension_numbers<[1], [0], [0], [1], [0, 0, 1, 1], [], []>} : vector<8x8xbf16>, vector<8x16xbf16>, vector<8x16xf32> -> vector<8x16xf32>
    %c8 = arith.constant 8 : index
    %c0_50 = arith.constant 0 : index
    %134 = vector.load %arg11[%c8, %c0_50] : memref<16x64xf32, #tpu.memory_space<vmem>>, vector<8x16xf32>
    tpu.vector_store %arg11[%c8, %c0_50], %133 {strides = array<i32>} : memref<16x64xf32, #tpu.memory_space<vmem>>, vector<8x16xf32>,
    %135 = vector.extract_strided_slice %112 {offsets = [0, 16], sizes = [8, 16], strides = [1, 1]} : vector<8x64xbf16> to vector<8x16xbf16>
    %136 = vector.extract_strided_slice %113 {offsets = [0, 16], sizes = [8, 16], strides = [1, 1]} : vector<8x64xbf16> to vector<8x16xbf16>
    %137 = vector.extract_strided_slice %114 {offsets = [0, 16], sizes = [8, 16], strides = [1, 1]} : vector<8x64xbf16> to vector<8x16xbf16>
    %cst_51 = arith.constant dense<0.000000e+00> : vector<8x8xf32>
    %138 = tpu.matmul %135, %136, %cst_51 {dimension_numbers = #tpu.dot_dimension_numbers<[1], [1], [0], [0], [0, 0, 1, 0], [], []>} : vector<8x16xbf16>, vector<8x16xbf16>, vector<8x8xf32> -> vector<8x8xf32>
    %139 = vector.extract_strided_slice %28 {offsets = [1, 0, 0], sizes = [1, 8, 8], strides = [1, 1, 1]} : vector<2x8x8xf32> to vector<1x8x8xf32>
    %140 = vector.shape_cast %139 : vector<1x8x8xf32> to vector<8x8xf32>
    %141 = arith.addf %138, %140 : vector<8x8xf32>
    %cst_52 = arith.constant dense<0xFF800000> : vector<8xf32>
    %142 = vector.multi_reduction <maximumf>, %141, %cst_52 [1] : vector<8x8xf32> to vector<8xf32>
    %143 = vector.shape_cast %142 : vector<8xf32> to vector<8x1xf32>
    %144 = vector.broadcast %143 : vector<8x1xf32> to vector<8x8xf32>
    %145 = arith.subf %141, %144 : vector<8x8xf32>
    %146 = math.exp %145 : vector<8x8xf32>
    %cst_53 = arith.constant dense<0.000000e+00> : vector<8xf32>
    %147 = vector.multi_reduction <add>, %146, %cst_53 [1] : vector<8x8xf32> to vector<8xf32>
    %148 = vector.shape_cast %147 : vector<8xf32> to vector<8x1xf32>
    %149 = tpu.reciprocal %148 {approx = true} : vector<8x1xf32> -> vector<8x1xf32>
    %150 = vector.broadcast %149 : vector<8x1xf32> to vector<8x8xf32>
    %151 = arith.mulf %146, %150 : vector<8x8xf32>
    %152 = arith.truncf %151 : vector<8x8xf32> to vector<8x8xbf16>
    %cst_54 = arith.constant dense<0.000000e+00> : vector<8x16xf32>
    %153 = tpu.matmul %152, %137, %cst_54 {dimension_numbers = #tpu.dot_dimension_numbers<[1], [0], [0], [1], [0, 0, 1, 1], [], []>} : vector<8x8xbf16>, vector<8x16xbf16>, vector<8x16xf32> -> vector<8x16xf32>
    %c8_55 = arith.constant 8 : index
    %c16_56 = arith.constant 16 : index
    %154 = vector.load %arg11[%c8_55, %c16_56] : memref<16x64xf32, #tpu.memory_space<vmem>>, vector<8x16xf32>
    tpu.vector_store %arg11[%c8_55, %c16_56], %153 {strides = array<i32>} : memref<16x64xf32, #tpu.memory_space<vmem>>, vector<8x16xf32>,
    %155 = vector.extract_strided_slice %112 {offsets = [0, 32], sizes = [8, 16], strides = [1, 1]} : vector<8x64xbf16> to vector<8x16xbf16>
    %156 = vector.extract_strided_slice %113 {offsets = [0, 32], sizes = [8, 16], strides = [1, 1]} : vector<8x64xbf16> to vector<8x16xbf16>
    %157 = vector.extract_strided_slice %114 {offsets = [0, 32], sizes = [8, 16], strides = [1, 1]} : vector<8x64xbf16> to vector<8x16xbf16>
    %cst_57 = arith.constant dense<0.000000e+00> : vector<8x8xf32>
    %158 = tpu.matmul %155, %156, %cst_57 {dimension_numbers = #tpu.dot_dimension_numbers<[1], [1], [0], [0], [0, 0, 1, 0], [], []>} : vector<8x16xbf16>, vector<8x16xbf16>, vector<8x8xf32> -> vector<8x8xf32>
    %159 = vector.extract_strided_slice %28 {offsets = [1, 0, 0], sizes = [1, 8, 8], strides = [1, 1, 1]} : vector<2x8x8xf32> to vector<1x8x8xf32>
    %160 = vector.shape_cast %159 : vector<1x8x8xf32> to vector<8x8xf32>
    %161 = arith.addf %158, %160 : vector<8x8xf32>
    %cst_58 = arith.constant dense<0xFF800000> : vector<8xf32>
    %162 = vector.multi_reduction <maximumf>, %161, %cst_58 [1] : vector<8x8xf32> to vector<8xf32>
    %163 = vector.shape_cast %162 : vector<8xf32> to vector<8x1xf32>
    %164 = vector.broadcast %163 : vector<8x1xf32> to vector<8x8xf32>
    %165 = arith.subf %161, %164 : vector<8x8xf32>
    %166 = math.exp %165 : vector<8x8xf32>
    %cst_59 = arith.constant dense<0.000000e+00> : vector<8xf32>
    %167 = vector.multi_reduction <add>, %166, %cst_59 [1] : vector<8x8xf32> to vector<8xf32>
    %168 = vector.shape_cast %167 : vector<8xf32> to vector<8x1xf32>
    %169 = tpu.reciprocal %168 {approx = true} : vector<8x1xf32> -> vector<8x1xf32>
    %170 = vector.broadcast %169 : vector<8x1xf32> to vector<8x8xf32>
    %171 = arith.mulf %166, %170 : vector<8x8xf32>
    %172 = arith.truncf %171 : vector<8x8xf32> to vector<8x8xbf16>
    %cst_60 = arith.constant dense<0.000000e+00> : vector<8x16xf32>
    %173 = tpu.matmul %172, %157, %cst_60 {dimension_numbers = #tpu.dot_dimension_numbers<[1], [0], [0], [1], [0, 0, 1, 1], [], []>} : vector<8x8xbf16>, vector<8x16xbf16>, vector<8x16xf32> -> vector<8x16xf32>
    %c8_61 = arith.constant 8 : index
    %c32_62 = arith.constant 32 : index
    %174 = vector.load %arg11[%c8_61, %c32_62] : memref<16x64xf32, #tpu.memory_space<vmem>>, vector<8x16xf32>
    tpu.vector_store %arg11[%c8_61, %c32_62], %173 {strides = array<i32>} : memref<16x64xf32, #tpu.memory_space<vmem>>, vector<8x16xf32>,
    %175 = vector.extract_strided_slice %112 {offsets = [0, 48], sizes = [8, 16], strides = [1, 1]} : vector<8x64xbf16> to vector<8x16xbf16>
    %176 = vector.extract_strided_slice %113 {offsets = [0, 48], sizes = [8, 16], strides = [1, 1]} : vector<8x64xbf16> to vector<8x16xbf16>
    %177 = vector.extract_strided_slice %114 {offsets = [0, 48], sizes = [8, 16], strides = [1, 1]} : vector<8x64xbf16> to vector<8x16xbf16>
    %cst_63 = arith.constant dense<0.000000e+00> : vector<8x8xf32>
    %178 = tpu.matmul %175, %176, %cst_63 {dimension_numbers = #tpu.dot_dimension_numbers<[1], [1], [0], [0], [0, 0, 1, 0], [], []>} : vector<8x16xbf16>, vector<8x16xbf16>, vector<8x8xf32> -> vector<8x8xf32>
    %179 = vector.extract_strided_slice %28 {offsets = [1, 0, 0], sizes = [1, 8, 8], strides = [1, 1, 1]} : vector<2x8x8xf32> to vector<1x8x8xf32>
    %180 = vector.shape_cast %179 : vector<1x8x8xf32> to vector<8x8xf32>
    %181 = arith.addf %178, %180 : vector<8x8xf32>
    %cst_64 = arith.constant dense<0xFF800000> : vector<8xf32>
    %182 = vector.multi_reduction <maximumf>, %181, %cst_64 [1] : vector<8x8xf32> to vector<8xf32>
    %183 = vector.shape_cast %182 : vector<8xf32> to vector<8x1xf32>
    %184 = vector.broadcast %183 : vector<8x1xf32> to vector<8x8xf32>
    %185 = arith.subf %181, %184 : vector<8x8xf32>
    %186 = math.exp %185 : vector<8x8xf32>
    %cst_65 = arith.constant dense<0.000000e+00> : vector<8xf32>
    %187 = vector.multi_reduction <add>, %186, %cst_65 [1] : vector<8x8xf32> to vector<8xf32>
    %188 = vector.shape_cast %187 : vector<8xf32> to vector<8x1xf32>
    %189 = tpu.reciprocal %188 {approx = true} : vector<8x1xf32> -> vector<8x1xf32>
    %190 = vector.broadcast %189 : vector<8x1xf32> to vector<8x8xf32>
    %191 = arith.mulf %186, %190 : vector<8x8xf32>
    %192 = arith.truncf %191 : vector<8x8xf32> to vector<8x8xbf16>
    %cst_66 = arith.constant dense<0.000000e+00> : vector<8x16xf32>
    %193 = tpu.matmul %192, %177, %cst_66 {dimension_numbers = #tpu.dot_dimension_numbers<[1], [0], [0], [1], [0, 0, 1, 1], [], []>} : vector<8x8xbf16>, vector<8x16xbf16>, vector<8x16xf32> -> vector<8x16xf32>
    %c8_67 = arith.constant 8 : index
    %c48_68 = arith.constant 48 : index
    %194 = vector.load %arg11[%c8_67, %c48_68] : memref<16x64xf32, #tpu.memory_space<vmem>>, vector<8x16xf32>
    tpu.vector_store %arg11[%c8_67, %c48_68], %193 {strides = array<i32>} : memref<16x64xf32, #tpu.memory_space<vmem>>, vector<8x16xf32>,
    %c0_69 = arith.constant 0 : index
    %c0_70 = arith.constant 0 : index
    %195 = vector.load %arg11[%c0_69, %c0_70] : memref<16x64xf32, #tpu.memory_space<vmem>>, vector<16x64xf32>
    %196 = arith.truncf %195 : vector<16x64xf32> to vector<16x64xbf16>
    %cst_71 = arith.constant dense<0.000000e+00> : vector<16x32xf32>
    %197 = tpu.matmul %196, %16, %cst_71 {dimension_numbers = #tpu.dot_dimension_numbers<[1], [0], [0], [1], [0, 0, 1, 1], [], []>} : vector<16x64xbf16>, vector<64x32xbf16>, vector<16x32xf32> -> vector<16x32xf32>
    %198 = vector.broadcast %17 : vector<1x32xf32> to vector<16x32xf32>
    %199 = arith.addf %197, %198 : vector<16x32xf32>
    %200 = vector.shape_cast %199 : vector<16x32xf32> to vector<2x8x32xf32>
    %c0_72 = arith.constant 0 : index
    %c0_73 = arith.constant 0 : index
    %c0_74 = arith.constant 0 : index
    %201 = vector.load %arg10[%c0_72, %c0_73, %c0_74] : memref<2x8x32xf32, #tpu.memory_space<vmem>>, vector<2x8x32xf32>
    tpu.vector_store %arg10[%c0_72, %c0_73, %c0_74], %200 {strides = array<i32>} : memref<2x8x32xf32, #tpu.memory_space<vmem>>, vector<2x8x32xf32>,
    return
  }
  func.func @transform_0(%arg0: i32) -> (i32, i32, i32) {
    %c0_i32 = arith.constant 0 : i32
    %c0_i32_0 = arith.constant 0 : i32
    %c0_i32_1 = arith.constant 0 : i32
    return %arg0, %c0_i32, %c0_i32_0 : i32, i32, i32
  }
  func.func @transform_1(%arg0: i32) -> (i32, i32, i32) {
    %c0_i32 = arith.constant 0 : i32
    %c0_i32_0 = arith.constant 0 : i32
    %c0_i32_1 = arith.constant 0 : i32
    return %arg0, %c0_i32, %c0_i32_0 : i32, i32, i32
  }
  func.func @transform_2(%arg0: i32) -> (i32, i32, i32) {
    %c0_i32 = arith.constant 0 : i32
    %c0_i32_0 = arith.constant 0 : i32
    %c0_i32_1 = arith.constant 0 : i32
    return %arg0, %c0_i32, %c0_i32_0 : i32, i32, i32
  }
  func.func @transform_3(%arg0: i32) -> (i32, i32, i32) {
    %c0_i32 = arith.constant 0 : i32
    %c0_i32_0 = arith.constant 0 : i32
    %c0_i32_1 = arith.constant 0 : i32
    return %arg0, %c0_i32, %c0_i32_0 : i32, i32, i32
  }
  func.func @transform_4(%arg0: i32) -> (i32, i32) {
    %c0_i32 = arith.constant 0 : i32
    %c0_i32_0 = arith.constant 0 : i32
    %c0_i32_1 = arith.constant 0 : i32
    return %c0_i32, %c0_i32_0 : i32, i32
  }
  func.func @transform_5(%arg0: i32) -> (i32, i32) {
    %c0_i32 = arith.constant 0 : i32
    %c0_i32_0 = arith.constant 0 : i32
    %c0_i32_1 = arith.constant 0 : i32
    return %c0_i32, %c0_i32_0 : i32, i32
  }
  func.func @transform_6(%arg0: i32) -> (i32, i32) {
    %c0_i32 = arith.constant 0 : i32
    %c0_i32_0 = arith.constant 0 : i32
    %c0_i32_1 = arith.constant 0 : i32
    return %c0_i32, %c0_i32_0 : i32, i32
  }
  func.func @transform_7(%arg0: i32) -> (i32, i32) {
    %c0_i32 = arith.constant 0 : i32
    %c0_i32_0 = arith.constant 0 : i32
    %c0_i32_1 = arith.constant 0 : i32
    return %c0_i32, %c0_i32_0 : i32, i32
  }
  func.func @transform_8(%arg0: i32) -> (i32, i32) {
    %c0_i32 = arith.constant 0 : i32
    %c0_i32_0 = arith.constant 0 : i32
    %c0_i32_1 = arith.constant 0 : i32
    return %c0_i32, %c0_i32_0 : i32, i32
  }
  func.func @transform_9(%arg0: i32) -> (i32, i32, i32) {
    %c0_i32 = arith.constant 0 : i32
    %c0_i32_0 = arith.constant 0 : i32
    %c0_i32_1 = arith.constant 0 : i32
    return %arg0, %c0_i32, %c0_i32_0 : i32, i32, i32
  }
}

</mosaic_0001>

<llo_original>
// kernel: tpu_custom_call.1
$region0: #{tpu_custom_call.1}
  #allocation0 [shape = 'u32[]', space=smem, size = 0x4, offset = 0x4, fixed_abs, tag = 'smem constant byte address 0x4 - core index']
  #allocation1 [shape = 'u32[72,128]{1,0:T(1,128)}', space=vmem, size = 0x9000, scoped, tag = 'internal scratch']
  #allocation2 [shape = 'f32[16,64]{1,0:T(8,128)}', space=vmem, size = 0x2000, scoped, tag = 'scratch operand']
  %s0 = inlined_call_operand.hbm [shape: f32[2,8,32], index: 0, kind: input, shape index: {}]
  %s1 = inlined_call_operand.hbm [shape: f32[2,8,32], index: 1, kind: input, shape index: {}]
  %s2 = inlined_call_operand.hbm [shape: f32[2,8,32], index: 2, kind: input, shape index: {}]
  %s3 = inlined_call_operand.hbm [shape: f32[2,8,8], index: 3, kind: input, shape index: {}]
  %s4 = inlined_call_operand.vmem [shape: f32[32,64], index: 4, kind: input, shape index: {}]
  %s5 = inlined_call_operand.vmem [shape: f32[32,64], index: 5, kind: input, shape index: {}]
  %s6 = inlined_call_operand.vmem [shape: f32[32,64], index: 6, kind: input, shape index: {}]
  %s7 = inlined_call_operand.vmem [shape: f32[64,32], index: 7, kind: input, shape index: {}]
  %s8 = inlined_call_operand.vmem [shape: f32[1,32], index: 8, kind: input, shape index: {}]
  %s9 = inlined_call_operand.hbm [shape: f32[2,8,32], index: 9, kind: output, shape index: {}]
  %s10 = sld [smem:[#allocation0]]
  $region62: #{tpu_custom_call.1} parent=0
    _
  %s12 = ssub.s32 1, %s10
  %s13 = scalar_select 0, %s12, %s10
  $region1: #{tpu_custom_call.1} parent=0
    #allocation3 [shape = 'u8[8192]{0}', space=vmem, size = 0x2000, scoped, tag = 'input window, operand 0, single buffered']
    #allocation4 [shape = 's32[1]{0}', space=sflag, size = 0x4, scoped, tag = 'scoped memory for tpu_custom_call.1']
    #allocation5 [shape = 's32[1]{0}', space=sflag, size = 0x4, scoped, tag = 'scoped memory for tpu_custom_call.1']
    #allocation6 [shape = 'u8[8192]{0}', space=vmem, size = 0x2000, scoped, tag = 'input window, operand 1, single buffered']
    #allocation7 [shape = 's32[1]{0}', space=sflag, size = 0x4, scoped, tag = 'scoped memory for tpu_custom_call.1']
    #allocation8 [shape = 'u8[8192]{0}', space=vmem, size = 0x2000, scoped, tag = 'input window, operand 2, single buffered']
    #allocation9 [shape = 'u8[8192]{0}', space=vmem, size = 0x2000, scoped, tag = 'input window, operand 3, single buffered']
    #allocation10 [shape = 's32[1]{0}', space=sflag, size = 0x4, scoped, tag = 'scoped memory for tpu_custom_call.1']
    #allocation11 [shape = 'u8[8192]{0}', space=vmem, size = 0x2000, scoped, tag = 'output window, operand 0, single buffered']
    %14 = vsyncpa [#allocation4], 0
    %15 = vsyncpa [#allocation7], 0
    %16 = vsyncpa [#allocation10], 0
    %17 = vsyncpa [#allocation5], 0
    // Predicated region
    $region2: #{tpu_custom_call.1} parent=1 // pred_check
      _
    $region3: #{tpu_custom_call.1} parent=1 // pred_check_branch
      %19 = sbr.rel (0) target = $region5
    $region4: #{tpu_custom_call.1} parent=1 // pred_region
      %21 = vsyncadd [#allocation4], 0
      %s22 = sshll.u32 %s0, 4
      %s23 = int_to_ptr.hbm [resolvable:$true] %s22
      %s24 = sshll.u32 [#allocation3], 4
      %s25 = int_to_ptr.vmem [resolvable:$true] %s24
      %30 = dma.hbm_to_vmem [thread:$0]  %s23, 256, %s25, [#allocation4], 128, 128, 8
    $region5: #{tpu_custom_call.1} parent=1 // pred_fallthru
      _
    // Predicated region
    $region6: #{tpu_custom_call.1} parent=1 // pred_check
      _
    $region7: #{tpu_custom_call.1} parent=1 // pred_check_branch
      %32 = sbr.rel (0) target = $region9
    $region8: #{tpu_custom_call.1} parent=1 // pred_region
      %34 = vsyncadd [#allocation7], 0
      %s35 = sshll.u32 %s1, 4
      %s36 = int_to_ptr.hbm [resolvable:$true] %s35
      %s37 = sshll.u32 [#allocation6], 4
      %s38 = int_to_ptr.vmem [resolvable:$true] %s37
      %43 = dma.hbm_to_vmem [thread:$0]  %s36, 256, %s38, [#allocation7], 128, 128, 8
    $region9: #{tpu_custom_call.1} parent=1 // pred_fallthru
      _
    // Predicated region
    $region10: #{tpu_custom_call.1} parent=1 // pred_check
      _
    $region11: #{tpu_custom_call.1} parent=1 // pred_check_branch
      %45 = sbr.rel (0) target = $region13
    $region12: #{tpu_custom_call.1} parent=1 // pred_region
      %47 = vsyncadd [#allocation7], 0
      %s48 = sshll.u32 %s2, 4
      %s49 = int_to_ptr.hbm [resolvable:$true] %s48
      %s50 = sshll.u32 [#allocation8], 4
      %s51 = int_to_ptr.vmem [resolvable:$true] %s50
      %56 = dma.hbm_to_vmem [thread:$0]  %s49, 256, %s51, [#allocation7], 128, 128, 8
    $region13: #{tpu_custom_call.1} parent=1 // pred_fallthru
      _
    // Predicated region
    $region14: #{tpu_custom_call.1} parent=1 // pred_check
      _
    $region15: #{tpu_custom_call.1} parent=1 // pred_check_branch
      %58 = sbr.rel (0) target = $region17
    $region16: #{tpu_custom_call.1} parent=1 // pred_region
      %60 = vsyncadd [#allocation10], 0
      %s61 = sshll.u32 %s3, 4
      %s62 = int_to_ptr.hbm [resolvable:$true] %s61
      %s63 = sshll.u32 [#allocation9], 4
      %s64 = int_to_ptr.vmem [resolvable:$true] %s63
      %69 = dma.hbm_to_vmem [thread:$0]  %s62, 256, %s64, [#allocation10], 128, 128, 8
    $region17: #{tpu_custom_call.1} parent=1 // pred_fallthru
      _
    // Predicated region
    $region18: #{tpu_custom_call.1} parent=1 // pred_check
      _
    $region19: #{tpu_custom_call.1} parent=1 // pred_check_branch
      %71 = sbr.rel (0) target = $region21
    $region20: #{tpu_custom_call.1} parent=1 // pred_region
      _
    $region21: #{tpu_custom_call.1} parent=1 // pred_fallthru
      _
    // Predicated region
    $region22: #{tpu_custom_call.1} parent=1 // pred_check
      _
    $region23: #{tpu_custom_call.1} parent=1 // pred_check_branch
      %73 = sbr.rel (0) target = $region25
    $region24: #{tpu_custom_call.1} parent=1 // pred_region
      _
    $region25: #{tpu_custom_call.1} parent=1 // pred_fallthru
      _
    // Predicated region
    $region26: #{tpu_custom_call.1} parent=1 // pred_check
      _
    $region27: #{tpu_custom_call.1} parent=1 // pred_check_branch
      %75 = sbr.rel (0) target = $region29
    $region28: #{tpu_custom_call.1} parent=1 // pred_region
      _
    $region29: #{tpu_custom_call.1} parent=1 // pred_fallthru
      _
    // Predicated region
    $region30: #{tpu_custom_call.1} parent=1 // pred_check
      _
    $region31: #{tpu_custom_call.1} parent=1 // pred_check_branch
      %77 = sbr.rel (0) target = $region33
    $region32: #{tpu_custom_call.1} parent=1 // pred_region
      _
    $region33: #{tpu_custom_call.1} parent=1 // pred_fallthru
      _
    // Predicated region
    $region34: #{tpu_custom_call.1} parent=1 // pred_check
      _
    $region35: #{tpu_custom_call.1} parent=1 // pred_check_branch
      %79 = sbr.rel (0) target = $region37
    $region36: #{tpu_custom_call.1} parent=1 // pred_region
      _
    $region37: #{tpu_custom_call.1} parent=1 // pred_fallthru
      _
    // Predicated region
    $region38: #{tpu_custom_call.1} parent=1 // pred_check
      _
    $region39: #{tpu_custom_call.1} parent=1 // pred_check_branch
      %81 = sbr.rel (0) target = $region41
    $region40: #{tpu_custom_call.1} parent=1 // pred_region
      %83 = dma.done [#allocation4], 256
    $region41: #{tpu_custom_call.1} parent=1 // pred_fallthru
      _
    // Predicated region
    $region42: #{tpu_custom_call.1} parent=1 // pred_check
      _
    $region43: #{tpu_custom_call.1} parent=1 // pred_check_branch
      %85 = sbr.rel (0) target = $region45
    $region44: #{tpu_custom_call.1} parent=1 // pred_region
      %87 = dma.done [#allocation7], 256
    $region45: #{tpu_custom_call.1} parent=1 // pred_fallthru
      _
    // Predicated region
    $region46: #{tpu_custom_call.1} parent=1 // pred_check
      _
    $region47: #{tpu_custom_call.1} parent=1 // pred_check_branch
      %89 = sbr.rel (0) target = $region49
    $region48: #{tpu_custom_call.1} parent=1 // pred_region
      %91 = dma.done [#allocation7], 256
    $region49: #{tpu_custom_call.1} parent=1 // pred_fallthru
      _
    // Predicated region
    $region50: #{tpu_custom_call.1} parent=1 // pred_check
      _
    $region51: #{tpu_custom_call.1} parent=1 // pred_check_branch
      %93 = sbr.rel (0) target = $region53
    $region52: #{tpu_custom_call.1} parent=1 // pred_region
      %95 = dma.done [#allocation10], 256
    $region53: #{tpu_custom_call.1} parent=1 // pred_fallthru
      _
    %v97 = vld [vmem:[#allocation3] sm:$0xff]
    %v98 = vld [vmem:[#allocation3 + $0x8] sm:$0xff]
    %v99 = vpack.c.bf16 %v98, %v97
    %v100 = vld [vmem:[#allocation6] sm:$0xff]
    %v101 = vld [vmem:[#allocation6 + $0x8] sm:$0xff]
    %v102 = vpack.c.bf16 %v101, %v100
    %v103 = vld [vmem:[#allocation8] sm:$0xff]
    %v104 = vld [vmem:[#allocation8 + $0x8] sm:$0xff]
    %v105 = vpack.c.bf16 %v104, %v103
    %v106 = vld [vmem:[%s4] sm:$0xff]
    %v107 = vld [vmem:[%s4 + $0x8] sm:$0xff]
    %v108 = vld [vmem:[%s4 + $0x10] sm:$0xff]
    %v109 = vld [vmem:[%s4 + $0x18] sm:$0xff]
    %v110 = vpack.c.bf16 %v107, %v106
    %v111 = vpack.c.bf16 %v109, %v108
    %v112 = vld [vmem:[%s5] sm:$0xff]
    %v113 = vld [vmem:[%s5 + $0x8] sm:$0xff]
    %v114 = vld [vmem:[%s5 + $0x10] sm:$0xff]
    %v115 = vld [vmem:[%s5 + $0x18] sm:$0xff]
    %v116 = vpack.c.bf16 %v113, %v112
    %v117 = vpack.c.bf16 %v115, %v114
    %v118 = vld [vmem:[%s6] sm:$0xff]
    %v119 = vld [vmem:[%s6 + $0x8] sm:$0xff]
    %v120 = vld [vmem:[%s6 + $0x10] sm:$0xff]
    %v121 = vld [vmem:[%s6 + $0x18] sm:$0xff]
    %v122 = vpack.c.bf16 %v119, %v118
    %v123 = vpack.c.bf16 %v121, %v120
    %v124 = vld [vmem:[%s7] sm:$0xff]
    %v125 = vld [vmem:[%s7 + $0x8] sm:$0xff]
    %v126 = vld [vmem:[%s7 + $0x10] sm:$0xff]
    %v127 = vld [vmem:[%s7 + $0x18] sm:$0xff]
    %v128 = vld [vmem:[%s7 + $0x20] sm:$0xff]
    %v129 = vld [vmem:[%s7 + $0x28] sm:$0xff]
    %v130 = vld [vmem:[%s7 + $0x30] sm:$0xff]
    %v131 = vld [vmem:[%s7 + $0x38] sm:$0xff]
    %v132 = vpack.c.bf16 %v125, %v124
    %v133 = vpack.c.bf16 %v127, %v126
    %v134 = vpack.c.bf16 %v129, %v128
    %v135 = vpack.c.bf16 %v131, %v130
    %v136 = vld [vmem:[%s8] sm:$0x1]
    %vm137 = vcmask 261120
    %v139 = vsel %vm137, %v99, 0
    %141 = vmatpush.bf16.msra.mxu0 0
    %142 = vmatpush.bf16.msra.mxu0 0
    %143 = vmatpush.bf16.msra.mxu0 0
    %144 = vmatpush.bf16.msra.mxu0 0
    %145 = vmatpush.bf16.msra.mxu0 0
    %146 = vmatpush.bf16.msra.mxu0 0
    %147 = vmatpush.bf16.msra.mxu0 %v111
    %148 = vmatpush.bf16.msra.mxu0 %v110
    %149 = vmatmul.bf16.gmra.mxu0 %v139
    %v150 = vpop.f32.mrf.mxu0
    %v151 = vadd.f32 0.0, %v150
    %v152 = vpop.f32.mrf.mxu0
    %v153 = vadd.f32 0.0, %v152
    %154 = vdwg.mxu0
    %v155 = vpack.c.bf16 %v151, %v151
    %v156 = vpack.c.bf16 %v153, %v153
    %v158 = vsel %vm137, %v102, 0
    %160 = vmatpush.bf16.msra.mxu0 0
    %161 = vmatpush.bf16.msra.mxu0 0
    %162 = vmatpush.bf16.msra.mxu0 0
    %163 = vmatpush.bf16.msra.mxu0 0
    %164 = vmatpush.bf16.msra.mxu0 0
    %165 = vmatpush.bf16.msra.mxu0 0
    %166 = vmatpush.bf16.msra.mxu0 %v117
    %167 = vmatpush.bf16.msra.mxu0 %v116
    %168 = vmatmul.bf16.gmra.mxu0 %v158
    %v169 = vpop.f32.mrf.mxu0
    %v170 = vadd.f32 0.0, %v169
    %v171 = vpop.f32.mrf.mxu0
    %v172 = vadd.f32 0.0, %v171
    %173 = vdwg.mxu0
    %v174 = vpack.c.bf16 %v170, %v170
    %v175 = vpack.c.bf16 %v172, %v172
    %v177 = vsel %vm137, %v105, 0
    %179 = vmatpush.bf16.msra.mxu0 0
    %180 = vmatpush.bf16.msra.mxu0 0
    %181 = vmatpush.bf16.msra.mxu0 0
    %182 = vmatpush.bf16.msra.mxu0 0
    %183 = vmatpush.bf16.msra.mxu0 0
    %184 = vmatpush.bf16.msra.mxu0 0
    %185 = vmatpush.bf16.msra.mxu0 %v123
    %186 = vmatpush.bf16.msra.mxu0 %v122
    %187 = vmatmul.bf16.gmra.mxu0 %v177
    %v188 = vpop.f32.mrf.mxu0
    %v189 = vadd.f32 0.0, %v188
    %v190 = vpop.f32.mrf.mxu0
    %v191 = vadd.f32 0.0, %v190
    %192 = vdwg.mxu0
    %v193 = vpack.c.bf16 %v189, %v189
    %v194 = vpack.c.bf16 %v191, %v191
    %v195 = vld [vmem:[#allocation9] sm:$0xff]
    %v196 = vld [vmem:[#allocation9 + $0x8] sm:$0xff]
    %v197 = vsub.f32 1.0, %v195
    %v198 = vsub.f32 1.0, %v196
    %v199 = vmul.f32 %v197, -1e+30
    %v200 = vmul.f32 %v198, -1e+30
    %vm201 = vcmask 130048
    %v203 = vsel %vm201, %v155, 0
    %v206 = vsel %vm201, %v174, 0
    %208 = vmatpush.bf16.xpose.msra.mxu0 0
    %209 = vmatpush.bf16.xpose.msra.mxu0 0
    %210 = vmatpush.bf16.xpose.msra.mxu0 0
    %211 = vmatpush.bf16.xpose.msra.mxu0 0
    %212 = vmatpush.bf16.xpose.msra.mxu0 0
    %213 = vmatpush.bf16.xpose.msra.mxu0 0
    %214 = vmatpush.bf16.xpose.msra.mxu0 0
    %215 = vmatpush.bf16.xpose.msra.mxu0 %v206
    %216 = vmatmul.bf16.gmra.mxu0 %v203
    %v217 = vpop.f32.mrf.mxu0
    %v218 = vadd.f32 %v199, %v217
    %v219 = vpop.f32.mrf.mxu0
    %220 = vdwg.mxu0
    %vm221 = vcmask 64512
    %v222 = vsel %vm221, %v218, -inf
    %223 = vmax.xlane.f32.xlu0 %v222
    %v224 = vpop.xlane.xlu0 %223
    %v225 = vsub.f32 %v218, %v224
    %v226 = vmul.f32 %v225, 1.442695
    %v227 = vpow.pop %v226
    %v228 = vsel %vm221, %v227, 0.0
    %229 = vadd.xlane.f32.xlu0 %v228
    %v230 = vpop.xlane.xlu0 %229
    %v231 = vrcp.pop %v230
    %v232 = vmul.f32 %v227, %v231
    %v233 = vpack.c.bf16 %v232, %v232
    %v235 = vsel %vm221, %v233, 0
    %vm237 = vcmask 1043456
    %v239 = vsel %vm237, %v193, 0
    %241 = vmatpush.bf16.msra.mxu0 0
    %242 = vmatpush.bf16.msra.mxu0 0
    %243 = vmatpush.bf16.msra.mxu0 0
    %244 = vmatpush.bf16.msra.mxu0 0
    %245 = vmatpush.bf16.msra.mxu0 0
    %246 = vmatpush.bf16.msra.mxu0 0
    %247 = vmatpush.bf16.msra.mxu0 0
    %248 = vmatpush.bf16.msra.mxu0 %v239
    %249 = vmatmul.bf16.gmra.mxu0 %v235
    %v250 = vpop.f32.mrf.mxu0
    %v251 = vadd.f32 0.0, %v250
    %v252 = vpop.f32.mrf.mxu0
    %253 = vdwg.mxu0
    %254 = vst.msk [vmem:[#allocation2] sm:$0xff] %vm201, %v251
    %v256 = vunpack.c.l.b16 %v155
    %v257 = vpack.c.b16 %v256, %v256
    %258 = vrot.lane.b32.xlu0 %v257, 112
    %v259 = vpop.permute.xlu0 %258
    %v261 = vunpack.c.l.b16 %v174
    %v262 = vpack.c.b16 %v261, %v261
    %263 = vrot.lane.b32.xlu0 %v262, 112
    %v264 = vpop.permute.xlu0 %263
    %v266 = vsel %vm201, %v259, 0
    %v269 = vsel %vm201, %v264, 0
    %271 = vmatpush.bf16.xpose.msra.mxu0 0
    %272 = vmatpush.bf16.xpose.msra.mxu0 0
    %273 = vmatpush.bf16.xpose.msra.mxu0 0
    %274 = vmatpush.bf16.xpose.msra.mxu0 0
    %275 = vmatpush.bf16.xpose.msra.mxu0 0
    %276 = vmatpush.bf16.xpose.msra.mxu0 0
    %277 = vmatpush.bf16.xpose.msra.mxu0 0
    %278 = vmatpush.bf16.xpose.msra.mxu0 %v269
    %279 = vmatmul.bf16.gmra.mxu0 %v266
    %v280 = vpop.f32.mrf.mxu0
    %v281 = vadd.f32 %v199, %v280
    %v282 = vpop.f32.mrf.mxu0
    %283 = vdwg.mxu0
    %v284 = vsel %vm221, %v281, -inf
    %285 = vmax.xlane.f32.xlu0 %v284
    %v286 = vpop.xlane.xlu0 %285
    %v287 = vsub.f32 %v281, %v286
    %v288 = vmul.f32 %v287, 1.442695
    %v289 = vpow.pop %v288
    %v290 = vsel %vm221, %v289, 0.0
    %291 = vadd.xlane.f32.xlu0 %v290
    %v292 = vpop.xlane.xlu0 %291
    %v293 = vrcp.pop %v292
    %v294 = vmul.f32 %v289, %v293
    %v295 = vpack.c.bf16 %v294, %v294
    %v297 = vunpack.c.l.b16 %v193
    %v298 = vpack.c.b16 %v297, %v297
    %299 = vrot.lane.b32.xlu0 %v298, 112
    %v300 = vpop.permute.xlu0 %299
    %v302 = vsel %vm221, %v295, 0
    %v305 = vsel %vm237, %v300, 0
    %307 = vmatpush.bf16.msra.mxu0 0
    %308 = vmatpush.bf16.msra.mxu0 0
    %309 = vmatpush.bf16.msra.mxu0 0
    %310 = vmatpush.bf16.msra.mxu0 0
    %311 = vmatpush.bf16.msra.mxu0 0
    %312 = vmatpush.bf16.msra.mxu0 0
    %313 = vmatpush.bf16.msra.mxu0 0
    %314 = vmatpush.bf16.msra.mxu0 %v305
    %315 = vmatmul.bf16.gmra.mxu0 %v302
    %v316 = vpop.f32.mrf.mxu0
    %v317 = vadd.f32 0.0, %v316
    %v318 = vpop.f32.mrf.mxu0
    %319 = vdwg.mxu0
    %321 = vrot.lane.b32.xlu0 %v317, 16
    %v322 = vpop.permute.xlu0 %321
    %vm324 = vcmask 261248
    %325 = vst.msk [vmem:[#allocation2] sm:$0xff] %vm324, %v322
    %326 = vrot.lane.b32.xlu0 %v257, 96
    %v327 = vpop.permute.xlu0 %326
    %328 = vrot.lane.b32.xlu0 %v262, 96
    %v329 = vpop.permute.xlu0 %328
    %v331 = vsel %vm201, %v327, 0
    %v334 = vsel %vm201, %v329, 0
    %336 = vmatpush.bf16.xpose.msra.mxu0 0
    %337 = vmatpush.bf16.xpose.msra.mxu0 0
    %338 = vmatpush.bf16.xpose.msra.mxu0 0
    %339 = vmatpush.bf16.xpose.msra.mxu0 0
    %340 = vmatpush.bf16.xpose.msra.mxu0 0
    %341 = vmatpush.bf16.xpose.msra.mxu0 0
    %342 = vmatpush.bf16.xpose.msra.mxu0 0
    %343 = vmatpush.bf16.xpose.msra.mxu0 %v334
    %344 = vmatmul.bf16.gmra.mxu0 %v331
    %v345 = vpop.f32.mrf.mxu0
    %v346 = vadd.f32 %v199, %v345
    %v347 = vpop.f32.mrf.mxu0
    %348 = vdwg.mxu0
    %v349 = vsel %vm221, %v346, -inf
    %350 = vmax.xlane.f32.xlu0 %v349
    %v351 = vpop.xlane.xlu0 %350
    %v352 = vsub.f32 %v346, %v351
    %v353 = vmul.f32 %v352, 1.442695
    %v354 = vpow.pop %v353
    %v355 = vsel %vm221, %v354, 0.0
    %356 = vadd.xlane.f32.xlu0 %v355
    %v357 = vpop.xlane.xlu0 %356
    %v358 = vrcp.pop %v357
    %v359 = vmul.f32 %v354, %v358
    %v360 = vpack.c.bf16 %v359, %v359
    %361 = vrot.lane.b32.xlu0 %v298, 96
    %v362 = vpop.permute.xlu0 %361
    %v364 = vsel %vm221, %v360, 0
    %v367 = vsel %vm237, %v362, 0
    %369 = vmatpush.bf16.msra.mxu0 0
    %370 = vmatpush.bf16.msra.mxu0 0
    %371 = vmatpush.bf16.msra.mxu0 0
    %372 = vmatpush.bf16.msra.mxu0 0
    %373 = vmatpush.bf16.msra.mxu0 0
    %374 = vmatpush.bf16.msra.mxu0 0
    %375 = vmatpush.bf16.msra.mxu0 0
    %376 = vmatpush.bf16.msra.mxu0 %v367
    %377 = vmatmul.bf16.gmra.mxu0 %v364
    %v378 = vpop.f32.mrf.mxu0
    %v379 = vadd.f32 0.0, %v378
    %v380 = vpop.f32.mrf.mxu0
    %381 = vdwg.mxu0
    %383 = vrot.lane.b32.xlu0 %v379, 32
    %v384 = vpop.permute.xlu0 %383
    %vm386 = vcmask 392448
    %387 = vst.msk [vmem:[#allocation2] sm:$0xff] %vm386, %v384
    %388 = vrot.lane.b32.xlu0 %v257, 80
    %v389 = vpop.permute.xlu0 %388
    %390 = vrot.lane.b32.xlu0 %v262, 80
    %v391 = vpop.permute.xlu0 %390
    %v393 = vsel %vm201, %v389, 0
    %v396 = vsel %vm201, %v391, 0
    %398 = vmatpush.bf16.xpose.msra.mxu0 0
    %399 = vmatpush.bf16.xpose.msra.mxu0 0
    %400 = vmatpush.bf16.xpose.msra.mxu0 0
    %401 = vmatpush.bf16.xpose.msra.mxu0 0
    %402 = vmatpush.bf16.xpose.msra.mxu0 0
    %403 = vmatpush.bf16.xpose.msra.mxu0 0
    %404 = vmatpush.bf16.xpose.msra.mxu0 0
    %405 = vmatpush.bf16.xpose.msra.mxu0 %v396
    %406 = vmatmul.bf16.gmra.mxu0 %v393
    %v407 = vpop.f32.mrf.mxu0
    %v408 = vadd.f32 %v199, %v407
    %v409 = vpop.f32.mrf.mxu0
    %410 = vdwg.mxu0
    %v411 = vsel %vm221, %v408, -inf
    %412 = vmax.xlane.f32.xlu0 %v411
    %v413 = vpop.xlane.xlu0 %412
    %v414 = vsub.f32 %v408, %v413
    %v415 = vmul.f32 %v414, 1.442695
    %v416 = vpow.pop %v415
    %v417 = vsel %vm221, %v416, 0.0
    %418 = vadd.xlane.f32.xlu0 %v417
    %v419 = vpop.xlane.xlu0 %418
    %v420 = vrcp.pop %v419
    %v421 = vmul.f32 %v416, %v420
    %v422 = vpack.c.bf16 %v421, %v421
    %423 = vrot.lane.b32.xlu0 %v298, 80
    %v424 = vpop.permute.xlu0 %423
    %v426 = vsel %vm221, %v422, 0
    %v429 = vsel %vm237, %v424, 0
    %431 = vmatpush.bf16.msra.mxu0 0
    %432 = vmatpush.bf16.msra.mxu0 0
    %433 = vmatpush.bf16.msra.mxu0 0
    %434 = vmatpush.bf16.msra.mxu0 0
    %435 = vmatpush.bf16.msra.mxu0 0
    %436 = vmatpush.bf16.msra.mxu0 0
    %437 = vmatpush.bf16.msra.mxu0 0
    %438 = vmatpush.bf16.msra.mxu0 %v429
    %439 = vmatmul.bf16.gmra.mxu0 %v426
    %v440 = vpop.f32.mrf.mxu0
    %v441 = vadd.f32 0.0, %v440
    %v442 = vpop.f32.mrf.mxu0
    %443 = vdwg.mxu0
    %445 = vrot.lane.b32.xlu0 %v441, 48
    %v446 = vpop.permute.xlu0 %445
    %vm448 = vcmask 523648
    %449 = vst.msk [vmem:[#allocation2] sm:$0xff] %vm448, %v446
    %v451 = vsel %vm201, %v156, 0
    %v454 = vsel %vm201, %v175, 0
    %456 = vmatpush.bf16.xpose.msra.mxu0 0
    %457 = vmatpush.bf16.xpose.msra.mxu0 0
    %458 = vmatpush.bf16.xpose.msra.mxu0 0
    %459 = vmatpush.bf16.xpose.msra.mxu0 0
    %460 = vmatpush.bf16.xpose.msra.mxu0 0
    %461 = vmatpush.bf16.xpose.msra.mxu0 0
    %462 = vmatpush.bf16.xpose.msra.mxu0 0
    %463 = vmatpush.bf16.xpose.msra.mxu0 %v454
    %464 = vmatmul.bf16.gmra.mxu0 %v451
    %v465 = vpop.f32.mrf.mxu0
    %v466 = vadd.f32 %v200, %v465
    %v467 = vpop.f32.mrf.mxu0
    %468 = vdwg.mxu0
    %v469 = vsel %vm221, %v466, -inf
    %470 = vmax.xlane.f32.xlu0 %v469
    %v471 = vpop.xlane.xlu0 %470
    %v472 = vsub.f32 %v466, %v471
    %v473 = vmul.f32 %v472, 1.442695
    %v474 = vpow.pop %v473
    %v475 = vsel %vm221, %v474, 0.0
    %476 = vadd.xlane.f32.xlu0 %v475
    %v477 = vpop.xlane.xlu0 %476
    %v478 = vrcp.pop %v477
    %v479 = vmul.f32 %v474, %v478
    %v480 = vpack.c.bf16 %v479, %v479
    %v482 = vsel %vm221, %v480, 0
    %v485 = vsel %vm237, %v194, 0
    %487 = vmatpush.bf16.msra.mxu0 0
    %488 = vmatpush.bf16.msra.mxu0 0
    %489 = vmatpush.bf16.msra.mxu0 0
    %490 = vmatpush.bf16.msra.mxu0 0
    %491 = vmatpush.bf16.msra.mxu0 0
    %492 = vmatpush.bf16.msra.mxu0 0
    %493 = vmatpush.bf16.msra.mxu0 0
    %494 = vmatpush.bf16.msra.mxu0 %v485
    %495 = vmatmul.bf16.gmra.mxu0 %v482
    %v496 = vpop.f32.mrf.mxu0
    %v497 = vadd.f32 0.0, %v496
    %v498 = vpop.f32.mrf.mxu0
    %499 = vdwg.mxu0
    %500 = vst.msk [vmem:[#allocation2 + $0x8] sm:$0xff] %vm201, %v497
    %v502 = vunpack.c.l.b16 %v156
    %v503 = vpack.c.b16 %v502, %v502
    %504 = vrot.lane.b32.xlu0 %v503, 112
    %v505 = vpop.permute.xlu0 %504
    %v507 = vunpack.c.l.b16 %v175
    %v508 = vpack.c.b16 %v507, %v507
    %509 = vrot.lane.b32.xlu0 %v508, 112
    %v510 = vpop.permute.xlu0 %509
    %v512 = vsel %vm201, %v505, 0
    %v515 = vsel %vm201, %v510, 0
    %517 = vmatpush.bf16.xpose.msra.mxu0 0
    %518 = vmatpush.bf16.xpose.msra.mxu0 0
    %519 = vmatpush.bf16.xpose.msra.mxu0 0
    %520 = vmatpush.bf16.xpose.msra.mxu0 0
    %521 = vmatpush.bf16.xpose.msra.mxu0 0
    %522 = vmatpush.bf16.xpose.msra.mxu0 0
    %523 = vmatpush.bf16.xpose.msra.mxu0 0
    %524 = vmatpush.bf16.xpose.msra.mxu0 %v515
    %525 = vmatmul.bf16.gmra.mxu0 %v512
    %v526 = vpop.f32.mrf.mxu0
    %v527 = vadd.f32 %v200, %v526
    %v528 = vpop.f32.mrf.mxu0
    %529 = vdwg.mxu0
    %v530 = vsel %vm221, %v527, -inf
    %531 = vmax.xlane.f32.xlu0 %v530
    %v532 = vpop.xlane.xlu0 %531
    %v533 = vsub.f32 %v527, %v532
    %v534 = vmul.f32 %v533, 1.442695
    %v535 = vpow.pop %v534
    %v536 = vsel %vm221, %v535, 0.0
    %537 = vadd.xlane.f32.xlu0 %v536
    %v538 = vpop.xlane.xlu0 %537
    %v539 = vrcp.pop %v538
    %v540 = vmul.f32 %v535, %v539
    %v541 = vpack.c.bf16 %v540, %v540
    %v543 = vunpack.c.l.b16 %v194
    %v544 = vpack.c.b16 %v543, %v543
    %545 = vrot.lane.b32.xlu0 %v544, 112
    %v546 = vpop.permute.xlu0 %545
    %v548 = vsel %vm221, %v541, 0
    %v551 = vsel %vm237, %v546, 0
    %553 = vmatpush.bf16.msra.mxu0 0
    %554 = vmatpush.bf16.msra.mxu0 0
    %555 = vmatpush.bf16.msra.mxu0 0
    %556 = vmatpush.bf16.msra.mxu0 0
    %557 = vmatpush.bf16.msra.mxu0 0
    %558 = vmatpush.bf16.msra.mxu0 0
    %559 = vmatpush.bf16.msra.mxu0 0
    %560 = vmatpush.bf16.msra.mxu0 %v551
    %561 = vmatmul.bf16.gmra.mxu0 %v548
    %v562 = vpop.f32.mrf.mxu0
    %v563 = vadd.f32 0.0, %v562
    %v564 = vpop.f32.mrf.mxu0
    %565 = vdwg.mxu0
    %567 = vrot.lane.b32.xlu0 %v563, 16
    %v568 = vpop.permute.xlu0 %567
    %570 = vst.msk [vmem:[#allocation2 + $0x8] sm:$0xff] %vm324, %v568
    %571 = vrot.lane.b32.xlu0 %v503, 96
    %v572 = vpop.permute.xlu0 %571
    %573 = vrot.lane.b32.xlu0 %v508, 96
    %v574 = vpop.permute.xlu0 %573
    %v576 = vsel %vm201, %v572, 0
    %v579 = vsel %vm201, %v574, 0
    %581 = vmatpush.bf16.xpose.msra.mxu0 0
    %582 = vmatpush.bf16.xpose.msra.mxu0 0
    %583 = vmatpush.bf16.xpose.msra.mxu0 0
    %584 = vmatpush.bf16.xpose.msra.mxu0 0
    %585 = vmatpush.bf16.xpose.msra.mxu0 0
    %586 = vmatpush.bf16.xpose.msra.mxu0 0
    %587 = vmatpush.bf16.xpose.msra.mxu0 0
    %588 = vmatpush.bf16.xpose.msra.mxu0 %v579
    %589 = vmatmul.bf16.gmra.mxu0 %v576
    %v590 = vpop.f32.mrf.mxu0
    %v591 = vadd.f32 %v200, %v590
    %v592 = vpop.f32.mrf.mxu0
    %593 = vdwg.mxu0
    %v594 = vsel %vm221, %v591, -inf
    %595 = vmax.xlane.f32.xlu0 %v594
    %v596 = vpop.xlane.xlu0 %595
    %v597 = vsub.f32 %v591, %v596
    %v598 = vmul.f32 %v597, 1.442695
    %v599 = vpow.pop %v598
    %v600 = vsel %vm221, %v599, 0.0
    %601 = vadd.xlane.f32.xlu0 %v600
    %v602 = vpop.xlane.xlu0 %601
    %v603 = vrcp.pop %v602
    %v604 = vmul.f32 %v599, %v603
    %v605 = vpack.c.bf16 %v604, %v604
    %606 = vrot.lane.b32.xlu0 %v544, 96
    %v607 = vpop.permute.xlu0 %606
    %v609 = vsel %vm221, %v605, 0
    %v612 = vsel %vm237, %v607, 0
    %614 = vmatpush.bf16.msra.mxu0 0
    %615 = vmatpush.bf16.msra.mxu0 0
    %616 = vmatpush.bf16.msra.mxu0 0
    %617 = vmatpush.bf16.msra.mxu0 0
    %618 = vmatpush.bf16.msra.mxu0 0
    %619 = vmatpush.bf16.msra.mxu0 0
    %620 = vmatpush.bf16.msra.mxu0 0
    %621 = vmatpush.bf16.msra.mxu0 %v612
    %622 = vmatmul.bf16.gmra.mxu0 %v609
    %v623 = vpop.f32.mrf.mxu0
    %v624 = vadd.f32 0.0, %v623
    %v625 = vpop.f32.mrf.mxu0
    %626 = vdwg.mxu0
    %628 = vrot.lane.b32.xlu0 %v624, 32
    %v629 = vpop.permute.xlu0 %628
    %631 = vst.msk [vmem:[#allocation2 + $0x8] sm:$0xff] %vm386, %v629
    %632 = vrot.lane.b32.xlu0 %v503, 80
    %v633 = vpop.permute.xlu0 %632
    %634 = vrot.lane.b32.xlu0 %v508, 80
    %v635 = vpop.permute.xlu0 %634
    %v637 = vsel %vm201, %v633, 0
    %v640 = vsel %vm201, %v635, 0
    %642 = vmatpush.bf16.xpose.msra.mxu0 0
    %643 = vmatpush.bf16.xpose.msra.mxu0 0
    %644 = vmatpush.bf16.xpose.msra.mxu0 0
    %645 = vmatpush.bf16.xpose.msra.mxu0 0
    %646 = vmatpush.bf16.xpose.msra.mxu0 0
    %647 = vmatpush.bf16.xpose.msra.mxu0 0
    %648 = vmatpush.bf16.xpose.msra.mxu0 0
    %649 = vmatpush.bf16.xpose.msra.mxu0 %v640
    %650 = vmatmul.bf16.gmra.mxu0 %v637
    %v651 = vpop.f32.mrf.mxu0
    %v652 = vadd.f32 %v200, %v651
    %v653 = vpop.f32.mrf.mxu0
    %654 = vdwg.mxu0
    %v655 = vsel %vm221, %v652, -inf
    %656 = vmax.xlane.f32.xlu0 %v655
    %v657 = vpop.xlane.xlu0 %656
    %v658 = vsub.f32 %v652, %v657
    %v659 = vmul.f32 %v658, 1.442695
    %v660 = vpow.pop %v659
    %v661 = vsel %vm221, %v660, 0.0
    %662 = vadd.xlane.f32.xlu0 %v661
    %v663 = vpop.xlane.xlu0 %662
    %v664 = vrcp.pop %v663
    %v665 = vmul.f32 %v660, %v664
    %v666 = vpack.c.bf16 %v665, %v665
    %667 = vrot.lane.b32.xlu0 %v544, 80
    %v668 = vpop.permute.xlu0 %667
    %v670 = vsel %vm221, %v666, 0
    %v673 = vsel %vm237, %v668, 0
    %675 = vmatpush.bf16.msra.mxu0 0
    %676 = vmatpush.bf16.msra.mxu0 0
    %677 = vmatpush.bf16.msra.mxu0 0
    %678 = vmatpush.bf16.msra.mxu0 0
    %679 = vmatpush.bf16.msra.mxu0 0
    %680 = vmatpush.bf16.msra.mxu0 0
    %681 = vmatpush.bf16.msra.mxu0 0
    %682 = vmatpush.bf16.msra.mxu0 %v673
    %683 = vmatmul.bf16.gmra.mxu0 %v670
    %v684 = vpop.f32.mrf.mxu0
    %v685 = vadd.f32 0.0, %v684
    %v686 = vpop.f32.mrf.mxu0
    %687 = vdwg.mxu0
    %689 = vrot.lane.b32.xlu0 %v685, 48
    %v690 = vpop.permute.xlu0 %689
    %692 = vst.msk [vmem:[#allocation2 + $0x8] sm:$0xff] %vm448, %v690
    %v693 = vld [vmem:[#allocation2] sm:$0xff]
    %v694 = vld [vmem:[#allocation2 + $0x8] sm:$0xff]
    %v695 = vpack.c.bf16 %v694, %v693
    %v697 = vperm.slane %v136, 0
    %vm699 = vcmask 523264
    %v701 = vsel %vm699, %v695, 0
    %703 = vmatpush.bf16.msra.mxu0 0
    %704 = vmatpush.bf16.msra.mxu0 0
    %705 = vmatpush.bf16.msra.mxu0 0
    %706 = vmatpush.bf16.msra.mxu0 0
    %707 = vmatpush.bf16.msra.mxu0 %v135
    %708 = vmatpush.bf16.msra.mxu0 %v134
    %709 = vmatpush.bf16.msra.mxu0 %v133
    %710 = vmatpush.bf16.msra.mxu0 %v132
    %711 = vmatmul.bf16.gmra.mxu0 %v701
    %v712 = vpop.f32.mrf.mxu0
    %v713 = vadd.f32 %v697, %v712
    %v714 = vpop.f32.mrf.mxu0
    %v715 = vadd.f32 %v697, %v714
    %716 = vdwg.mxu0
    %717 = vst.msk [vmem:[#allocation11] sm:$0xff] %vm137, %v713
    %718 = vst.msk [vmem:[#allocation11 + $0x8] sm:$0xff] %vm137, %v715
    // Predicated region
    $region54: #{tpu_custom_call.1} parent=1 // pred_check
      _
    $region55: #{tpu_custom_call.1} parent=1 // pred_check_branch
      %720 = sbr.rel (0) target = $region57
    $region56: #{tpu_custom_call.1} parent=1 // pred_region
      %722 = vsyncadd [#allocation5], 0
      %s723 = sshll.u32 [#allocation11], 4
      %s724 = int_to_ptr.vmem [resolvable:$true] %s723
      %s725 = sshll.u32 %s9, 4
      %s726 = int_to_ptr.hbm [resolvable:$true] %s725
      %731 = dma.vmem_to_hbm [thread:$0]  %s724, 256, %s726, [#allocation5], 128, 128, 8
    $region57: #{tpu_custom_call.1} parent=1 // pred_fallthru
      _
    // Predicated region
    $region58: #{tpu_custom_call.1} parent=1 // pred_check
      _
    $region59: #{tpu_custom_call.1} parent=1 // pred_check_branch
      %733 = sbr.rel (0) target = $region61
    $region60: #{tpu_custom_call.1} parent=1 // pred_region
      %735 = dma.done [#allocation5], 256
    $region61: #{tpu_custom_call.1} parent=1 // pred_fallthru
      _
    %736 = vsyncpa [#allocation4], 1
    %737 = vsyncpa [#allocation7], 1
    %738 = vsyncpa [#allocation10], 1
    %739 = vsyncpa [#allocation5], 1

</llo_original>
